<compile_context>
chip_gen: v7x
topology: tpu7x:2x2x1
jax: 0.10.0
libtpu: 0.0.40
codegen_flags: <defaults>
</compile_context>

<pallas_src>
import functools

import jax
import jax.numpy as jnp
from jax.experimental import pallas as pl
from jax.experimental.pallas import tpu as pltpu


def _mgu_kernel(x1_ref, x2_ref, x3_ref,
                wf1_ref, wf2_ref, wf3_ref,
                bz_ref, bh_ref,
                out_ref, *, d_out):
    f32 = jnp.float32

    # One lane-dense MXU matmul per modality: (Bt, D_in) @ (D_in, 4*D_out).
    #   cols [0 : 3*D_out]   -> this modality's row-block contribution to z1|z2|z3
    #   cols [3*D_out : ...] -> this modality's hidden projection (pre-tanh)
    y1 = jnp.dot(x1_ref[...], wf1_ref[...], preferred_element_type=f32)
    y2 = jnp.dot(x2_ref[...], wf2_ref[...], preferred_element_type=f32)
    y3 = jnp.dot(x3_ref[...], wf3_ref[...], preferred_element_type=f32)

    dz = 3 * d_out
    # Gates: cat(x1,x2,x3) @ [Wz1|Wz2|Wz3] == sum_k x_k @ (row block k).
    z = jax.nn.sigmoid(y1[:, :dz] + y2[:, :dz] + y3[:, :dz] + bz_ref[...])

    bh = bh_ref[...]
    # Incremental gated sum: only one h_i live at a time (vreg pressure).
    h1 = jnp.tanh(y1[:, dz:] + bh[:, 0 * d_out:1 * d_out])
    acc = z[:, 0 * d_out:1 * d_out] * h1
    h2 = jnp.tanh(y2[:, dz:] + bh[:, 1 * d_out:2 * d_out])
    acc = acc + z[:, 1 * d_out:2 * d_out] * h2
    h3 = jnp.tanh(y3[:, dz:] + bh[:, 2 * d_out:3 * d_out])
    acc = acc + z[:, 2 * d_out:3 * d_out] * h3

    out_ref[...] = acc.astype(out_ref.dtype)


def fuse_params(p, compute_dtype=jnp.bfloat16):
    """One-time prep: build the per-modality fused (D_in, 4*D_out) bf16 weights
    and fused f32 bias rows from PyTorch-layout (D_in, D_out) params."""
    d_in = p["wh1"].shape[0]
    wf = []
    for k, wh in enumerate((p["wh1"], p["wh2"], p["wh3"])):
        rows = slice(k * d_in, (k + 1) * d_in)
        wf_k = jnp.concatenate(
            [p["wz1"][rows], p["wz2"][rows], p["wz3"][rows], wh], axis=1)
        wf.append(wf_k.astype(compute_dtype))
    bz = jnp.concatenate([p["bz1"], p["bz2"], p["bz3"]], axis=1).astype(jnp.float32)
    bh = jnp.concatenate([p["bh1"], p["bh2"], p["bh3"]], axis=1).astype(jnp.float32)
    return dict(wf1=wf[0], wf2=wf[1], wf3=wf[2], bz=bz, bh=bh)


def multimodal_gated_unit(x1, x2, x3, fused, *, b_tile=None,
                          compute_dtype=jnp.bfloat16):
    """mode=0 forward. x_i: (B, D_in). Returns (B, D_out) float32."""
    B, d_in = x1.shape
    d_out = fused["wf1"].shape[1] // 4

    if b_tile is None:
        # Full batch if small (legal full-dim block); otherwise a large
        # 8-aligned tile so the batch grid pipelines and shards across cores.
        b_tile = B if B <= 512 else 512
    grid = (pl.cdiv(B, b_tile),)

    x_spec = pl.BlockSpec((b_tile, d_in), lambda i: (i, 0))
    w_spec = pl.BlockSpec((d_in, 4 * d_out), lambda i: (0, 0))    # resident
    b_spec = pl.BlockSpec((1, 3 * d_out), lambda i: (0, 0))       # resident
    out_spec = pl.BlockSpec((b_tile, d_out), lambda i: (i, 0))

    kernel = functools.partial(_mgu_kernel, d_out=d_out)
    return pl.pallas_call(
        kernel,
        out_shape=jax.ShapeDtypeStruct((B, d_out), jnp.float32),
        grid=grid,
        in_specs=[x_spec, x_spec, x_spec, w_spec, w_spec, w_spec, b_spec, b_spec],
        out_specs=out_spec,
        compiler_params=pltpu.CompilerParams(
            dimension_semantics=("parallel",)),
    )(x1.astype(compute_dtype), x2.astype(compute_dtype), x3.astype(compute_dtype),
      fused["wf1"], fused["wf2"], fused["wf3"], fused["bz"], fused["bh"])


def _init_linear(key, fan_in, fan_out):
    """PyTorch nn.Linear-style uniform init. W laid out (fan_in, fan_out)
    so y = x @ W + b; bias kept 2D (1, fan_out)."""
    kw, kb = jax.random.split(key)
    bound = 1.0 / jnp.sqrt(jnp.float32(fan_in))
    w = jax.random.uniform(kw, (fan_in, fan_out), jnp.float32, -bound, bound)
    b = jax.random.uniform(kb, (1, fan_out), jnp.float32, -bound, bound)
    return w, b


def make_params(key, input_dimension, output_dimension):
    keys = jax.random.split(key, 6)
    wh1, bh1 = _init_linear(keys[0], input_dimension, output_dimension)
    wh2, bh2 = _init_linear(keys[1], input_dimension, output_dimension)
    wh3, bh3 = _init_linear(keys[2], input_dimension, output_dimension)
    wz1, bz1 = _init_linear(keys[3], 3 * input_dimension, output_dimension)
    wz2, bz2 = _init_linear(keys[4], 3 * input_dimension, output_dimension)
    wz3, bz3 = _init_linear(keys[5], 3 * input_dimension, output_dimension)
    return dict(wh1=wh1, bh1=bh1, wh2=wh2, bh2=bh2, wh3=wh3, bh3=bh3,
                wz1=wz1, bz1=bz1, wz2=wz2, bz2=bz2, wz3=wz3, bz3=bz3)


def reference(x1, x2, x3, p):
    """Pure-f32 JAX reference matching the PyTorch module (mode=0)."""
    h1 = jnp.tanh(x1 @ p["wh1"] + p["bh1"])
    h2 = jnp.tanh(x2 @ p["wh2"] + p["bh2"])
    h3 = jnp.tanh(x3 @ p["wh3"] + p["bh3"])
    xc = jnp.concatenate([x1, x2, x3], axis=1)
    z1 = jax.nn.sigmoid(xc @ p["wz1"] + p["bz1"])
    z2 = jax.nn.sigmoid(xc @ p["wz2"] + p["bz2"])
    z3 = jax.nn.sigmoid(xc @ p["wz3"] + p["bz3"])
    return z1 * h1 + z2 * h2 + z3 * h3


if __name__ == "__main__":
    B, D_IN, D_OUT = 8, 32, 32

    root = jax.random.PRNGKey(0)
    k_x1, k_x2, k_x3, k_p = jax.random.split(root, 4)
    x1 = jax.random.normal(k_x1, (B, D_IN), jnp.float32)
    x2 = jax.random.normal(k_x2, (B, D_IN), jnp.float32)
    x3 = jax.random.normal(k_x3, (B, D_IN), jnp.float32)
    params = make_params(k_p, D_IN, D_OUT)
    fused = fuse_params(params)

    out = multimodal_gated_unit(x1, x2, x3, fused)
    out = jax.block_until_ready(out)

    ref = reference(x1, x2, x3, params)
    assert out.shape == (B, D_OUT)
    # bf16 MXU inputs + f32 accumulation vs pure-f32 reference -> loose tol.
    assert jnp.allclose(out, ref, atol=2e-2, rtol=2e-2), "mismatch vs JAX reference"

    print("KERNEL_OK")
</pallas_src>

<mosaic_0001>
module attributes {stable_mosaic.version = 11 : i64} {
  func.func @_mgu_kernel(%arg0: i32, %arg1: memref<8x32xbf16, #tpu.memory_space<vmem>>, %arg2: memref<8x32xbf16, #tpu.memory_space<vmem>>, %arg3: memref<8x32xbf16, #tpu.memory_space<vmem>>, %arg4: memref<32x128xbf16, #tpu.memory_space<vmem>>, %arg5: memref<32x128xbf16, #tpu.memory_space<vmem>>, %arg6: memref<32x128xbf16, #tpu.memory_space<vmem>>, %arg7: memref<1x96xf32, #tpu.memory_space<vmem>>, %arg8: memref<1x96xf32, #tpu.memory_space<vmem>>, %arg9: memref<8x32xf32, #tpu.memory_space<vmem>>) attributes {dimension_semantics = [#tpu.dimension_semantics<parallel>], iteration_bounds = array<i64: 1>, scalar_prefetch = 0 : i64, scratch_operands = 0 : i64, tpu.core_type = #tpu.core_type<tc>, window_params = [{transform_indices = @transform_0, window_bounds = array<i64: 8, 32>}, {transform_indices = @transform_1, window_bounds = array<i64: 8, 32>}, {transform_indices = @transform_2, window_bounds = array<i64: 8, 32>}, {pipeline_mode = #tpu.pipeline_mode<synchronous>, transform_indices = @transform_3, window_bounds = array<i64: 32, 128>}, {pipeline_mode = #tpu.pipeline_mode<synchronous>, transform_indices = @transform_4, window_bounds = array<i64: 32, 128>}, {pipeline_mode = #tpu.pipeline_mode<synchronous>, transform_indices = @transform_5, window_bounds = array<i64: 32, 128>}, {pipeline_mode = #tpu.pipeline_mode<synchronous>, transform_indices = @transform_6, window_bounds = array<i64: 1, 96>}, {pipeline_mode = #tpu.pipeline_mode<synchronous>, transform_indices = @transform_7, window_bounds = array<i64: 1, 96>}, {transform_indices = @transform_8, window_bounds = array<i64: 8, 32>}]} {
    %c0 = arith.constant 0 : index
    %c0_0 = arith.constant 0 : index
    %0 = vector.load %arg1[%c0, %c0_0] : memref<8x32xbf16, #tpu.memory_space<vmem>>, vector<8x32xbf16>
    %c0_1 = arith.constant 0 : index
    %c0_2 = arith.constant 0 : index
    %1 = vector.load %arg4[%c0_1, %c0_2] : memref<32x128xbf16, #tpu.memory_space<vmem>>, vector<32x128xbf16>
    %cst = arith.constant dense<0.000000e+00> : vector<8x128xf32>
    %2 = tpu.matmul %0, %1, %cst {dimension_numbers = #tpu.dot_dimension_numbers<[1], [0], [0], [1], [0, 0, 1, 1], [], []>} : vector<8x32xbf16>, vector<32x128xbf16>, vector<8x128xf32> -> vector<8x128xf32>
    %c0_3 = arith.constant 0 : index
    %c0_4 = arith.constant 0 : index
    %3 = vector.load %arg2[%c0_3, %c0_4] : memref<8x32xbf16, #tpu.memory_space<vmem>>, vector<8x32xbf16>
    %c0_5 = arith.constant 0 : index
    %c0_6 = arith.constant 0 : index
    %4 = vector.load %arg5[%c0_5, %c0_6] : memref<32x128xbf16, #tpu.memory_space<vmem>>, vector<32x128xbf16>
    %cst_7 = arith.constant dense<0.000000e+00> : vector<8x128xf32>
    %5 = tpu.matmul %3, %4, %cst_7 {dimension_numbers = #tpu.dot_dimension_numbers<[1], [0], [0], [1], [0, 0, 1, 1], [], []>} : vector<8x32xbf16>, vector<32x128xbf16>, vector<8x128xf32> -> vector<8x128xf32>
    %c0_8 = arith.constant 0 : index
    %c0_9 = arith.constant 0 : index
    %6 = vector.load %arg3[%c0_8, %c0_9] : memref<8x32xbf16, #tpu.memory_space<vmem>>, vector<8x32xbf16>
    %c0_10 = arith.constant 0 : index
    %c0_11 = arith.constant 0 : index
    %7 = vector.load %arg6[%c0_10, %c0_11] : memref<32x128xbf16, #tpu.memory_space<vmem>>, vector<32x128xbf16>
    %cst_12 = arith.constant dense<0.000000e+00> : vector<8x128xf32>
    %8 = tpu.matmul %6, %7, %cst_12 {dimension_numbers = #tpu.dot_dimension_numbers<[1], [0], [0], [1], [0, 0, 1, 1], [], []>} : vector<8x32xbf16>, vector<32x128xbf16>, vector<8x128xf32> -> vector<8x128xf32>
    %9 = vector.extract_strided_slice %2 {offsets = [0, 0], sizes = [8, 96], strides = [1, 1]} : vector<8x128xf32> to vector<8x96xf32>
    %10 = vector.extract_strided_slice %5 {offsets = [0, 0], sizes = [8, 96], strides = [1, 1]} : vector<8x128xf32> to vector<8x96xf32>
    %11 = arith.addf %9, %10 : vector<8x96xf32>
    %12 = vector.extract_strided_slice %8 {offsets = [0, 0], sizes = [8, 96], strides = [1, 1]} : vector<8x128xf32> to vector<8x96xf32>
    %13 = arith.addf %11, %12 : vector<8x96xf32>
    %c0_13 = arith.constant 0 : index
    %c0_14 = arith.constant 0 : index
    %14 = vector.load %arg7[%c0_13, %c0_14] : memref<1x96xf32, #tpu.memory_space<vmem>>, vector<1x96xf32>
    %15 = vector.broadcast %14 : vector<1x96xf32> to vector<8x96xf32>
    %16 = arith.addf %13, %15 : vector<8x96xf32>
    %17 = arith.negf %16 : vector<8x96xf32>
    %18 = math.exp %17 : vector<8x96xf32>
    %cst_15 = arith.constant 1.000000e+00 : f32
    %19 = vector.broadcast %cst_15 : f32 to vector<8x96xf32>
    %20 = arith.addf %19, %18 : vector<8x96xf32>
    %21 = arith.divf %19, %20 : vector<8x96xf32>
    %c0_16 = arith.constant 0 : index
    %c0_17 = arith.constant 0 : index
    %22 = vector.load %arg8[%c0_16, %c0_17] : memref<1x96xf32, #tpu.memory_space<vmem>>, vector<1x96xf32>
    %23 = vector.extract_strided_slice %2 {offsets = [0, 96], sizes = [8, 32], strides = [1, 1]} : vector<8x128xf32> to vector<8x32xf32>
    %24 = vector.extract_strided_slice %22 {offsets = [0, 0], sizes = [1, 32], strides = [1, 1]} : vector<1x96xf32> to vector<1x32xf32>
    %25 = vector.broadcast %24 : vector<1x32xf32> to vector<8x32xf32>
    %26 = arith.addf %23, %25 : vector<8x32xf32>
    %27 = math.tanh %26 : vector<8x32xf32>
    %28 = vector.extract_strided_slice %21 {offsets = [0, 0], sizes = [8, 32], strides = [1, 1]} : vector<8x96xf32> to vector<8x32xf32>
    %29 = arith.mulf %28, %27 : vector<8x32xf32>
    %30 = vector.extract_strided_slice %5 {offsets = [0, 96], sizes = [8, 32], strides = [1, 1]} : vector<8x128xf32> to vector<8x32xf32>
    %31 = vector.extract_strided_slice %22 {offsets = [0, 32], sizes = [1, 32], strides = [1, 1]} : vector<1x96xf32> to vector<1x32xf32>
    %32 = vector.broadcast %31 : vector<1x32xf32> to vector<8x32xf32>
    %33 = arith.addf %30, %32 : vector<8x32xf32>
    %34 = math.tanh %33 : vector<8x32xf32>
    %35 = vector.extract_strided_slice %21 {offsets = [0, 32], sizes = [8, 32], strides = [1, 1]} : vector<8x96xf32> to vector<8x32xf32>
    %36 = arith.mulf %35, %34 : vector<8x32xf32>
    %37 = arith.addf %29, %36 : vector<8x32xf32>
    %38 = vector.extract_strided_slice %8 {offsets = [0, 96], sizes = [8, 32], strides = [1, 1]} : vector<8x128xf32> to vector<8x32xf32>
    %39 = vector.extract_strided_slice %22 {offsets = [0, 64], sizes = [1, 32], strides = [1, 1]} : vector<1x96xf32> to vector<1x32xf32>
    %40 = vector.broadcast %39 : vector<1x32xf32> to vector<8x32xf32>
    %41 = arith.addf %38, %40 : vector<8x32xf32>
    %42 = math.tanh %41 : vector<8x32xf32>
    %43 = vector.extract_strided_slice %21 {offsets = [0, 64], sizes = [8, 32], strides = [1, 1]} : vector<8x96xf32> to vector<8x32xf32>
    %44 = arith.mulf %43, %42 : vector<8x32xf32>
    %45 = arith.addf %37, %44 : vector<8x32xf32>
    %c0_18 = arith.constant 0 : index
    %c0_19 = arith.constant 0 : index
    %46 = vector.load %arg9[%c0_18, %c0_19] : memref<8x32xf32, #tpu.memory_space<vmem>>, vector<8x32xf32>
    tpu.vector_store %arg9[%c0_18, %c0_19], %45 {strides = array<i32>} : memref<8x32xf32, #tpu.memory_space<vmem>>, vector<8x32xf32>,
    return
  }
  func.func @transform_0(%arg0: i32) -> (i32, i32) {
    %c0_i32 = arith.constant 0 : i32
    %c0_i32_0 = arith.constant 0 : i32
    return %arg0, %c0_i32 : i32, i32
  }
  func.func @transform_1(%arg0: i32) -> (i32, i32) {
    %c0_i32 = arith.constant 0 : i32
    %c0_i32_0 = arith.constant 0 : i32
    return %arg0, %c0_i32 : i32, i32
  }
  func.func @transform_2(%arg0: i32) -> (i32, i32) {
    %c0_i32 = arith.constant 0 : i32
    %c0_i32_0 = arith.constant 0 : i32
    return %arg0, %c0_i32 : i32, i32
  }
  func.func @transform_3(%arg0: i32) -> (i32, i32) {
    %c0_i32 = arith.constant 0 : i32
    %c0_i32_0 = arith.constant 0 : i32
    %c0_i32_1 = arith.constant 0 : i32
    return %c0_i32, %c0_i32_0 : i32, i32
  }
  func.func @transform_4(%arg0: i32) -> (i32, i32) {
    %c0_i32 = arith.constant 0 : i32
    %c0_i32_0 = arith.constant 0 : i32
    %c0_i32_1 = arith.constant 0 : i32
    return %c0_i32, %c0_i32_0 : i32, i32
  }
  func.func @transform_5(%arg0: i32) -> (i32, i32) {
    %c0_i32 = arith.constant 0 : i32
    %c0_i32_0 = arith.constant 0 : i32
    %c0_i32_1 = arith.constant 0 : i32
    return %c0_i32, %c0_i32_0 : i32, i32
  }
  func.func @transform_6(%arg0: i32) -> (i32, i32) {
    %c0_i32 = arith.constant 0 : i32
    %c0_i32_0 = arith.constant 0 : i32
    %c0_i32_1 = arith.constant 0 : i32
    return %c0_i32, %c0_i32_0 : i32, i32
  }
  func.func @transform_7(%arg0: i32) -> (i32, i32) {
    %c0_i32 = arith.constant 0 : i32
    %c0_i32_0 = arith.constant 0 : i32
    %c0_i32_1 = arith.constant 0 : i32
    return %c0_i32, %c0_i32_0 : i32, i32
  }
  func.func @transform_8(%arg0: i32) -> (i32, i32) {
    %c0_i32 = arith.constant 0 : i32
    %c0_i32_0 = arith.constant 0 : i32
    return %arg0, %c0_i32 : i32, i32
  }
}

</mosaic_0001>

<llo_original>
// kernel: tpu_custom_call.1
$region0: #{tpu_custom_call.1}
  #allocation0 [shape = 'u32[]', space=smem, size = 0x4, offset = 0x4, fixed_abs, tag = 'smem constant byte address 0x4 - core index']
  #allocation1 [shape = 'u32[144,128]{1,0:T(1,128)}', space=vmem, size = 0x12000, scoped, tag = 'internal scratch']
  %s0 = inlined_call_operand.hbm [shape: bf16[8,32], index: 0, kind: input, shape index: {}]
  %s1 = inlined_call_operand.hbm [shape: bf16[8,32], index: 1, kind: input, shape index: {}]
  %s2 = inlined_call_operand.hbm [shape: bf16[8,32], index: 2, kind: input, shape index: {}]
  %s3 = inlined_call_operand.hbm [shape: bf16[32,128], index: 3, kind: input, shape index: {}]
  %s4 = inlined_call_operand.hbm [shape: bf16[32,128], index: 4, kind: input, shape index: {}]
  %s5 = inlined_call_operand.vmem [shape: bf16[32,128], index: 5, kind: input, shape index: {}]
  %s6 = inlined_call_operand.vmem [shape: f32[1,96], index: 6, kind: input, shape index: {}]
  %s7 = inlined_call_operand.vmem [shape: f32[1,96], index: 7, kind: input, shape index: {}]
  %s8 = inlined_call_operand.hbm [shape: f32[8,32], index: 8, kind: output, shape index: {}]
  %s9 = sld [smem:[#allocation0]]
  $region62: #{tpu_custom_call.1} parent=0
    _
  %s11 = ssub.s32 1, %s9
  %s12 = scalar_select 0, %s11, %s9
  $region1: #{tpu_custom_call.1} parent=0
    #allocation2 [shape = 'u8[2048]{0}', space=vmem, size = 0x800, scoped, tag = 'input window, operand 0, single buffered']
    #allocation3 [shape = 's32[1]{0}', space=sflag, size = 0x4, scoped, tag = 'scoped memory for tpu_custom_call.1']
    #allocation4 [shape = 's32[1]{0}', space=sflag, size = 0x4, scoped, tag = 'scoped memory for tpu_custom_call.1']
    #allocation5 [shape = 'u8[2048]{0}', space=vmem, size = 0x800, scoped, tag = 'input window, operand 1, single buffered']
    #allocation6 [shape = 's32[1]{0}', space=sflag, size = 0x4, scoped, tag = 'scoped memory for tpu_custom_call.1']
    #allocation7 [shape = 'u8[2048]{0}', space=vmem, size = 0x800, scoped, tag = 'input window, operand 2, single buffered']
    #allocation8 [shape = 'u8[8192]{0}', space=vmem, size = 0x2000, scoped, tag = 'input window, operand 3, single buffered']
    #allocation9 [shape = 's32[1]{0}', space=sflag, size = 0x4, scoped, tag = 'scoped memory for tpu_custom_call.1']
    #allocation10 [shape = 'u8[8192]{0}', space=vmem, size = 0x2000, scoped, tag = 'input window, operand 4, single buffered']
    #allocation11 [shape = 'u8[4096]{0}', space=vmem, size = 0x1000, scoped, tag = 'output window, operand 0, single buffered']
    %13 = vsyncpa [#allocation3], 0
    %14 = vsyncpa [#allocation6], 0
    %15 = vsyncpa [#allocation9], 0
    %16 = vsyncpa [#allocation4], 0
    // Predicated region
    $region2: #{tpu_custom_call.1} parent=1 // pred_check
      _
    $region3: #{tpu_custom_call.1} parent=1 // pred_check_branch
      %18 = sbr.rel (0) target = $region5
    $region4: #{tpu_custom_call.1} parent=1 // pred_region
      %s20 = ssub.s32 64, 64
      %21 = vsyncadd [#allocation3], %s20
      %s23 = sshll.u32 [#allocation2], 4
      %s24 = int_to_ptr.vmem [resolvable:$true] %s23
      %26 = dma.hbm_to_vmem [thread:$0]  %s0, 64, %s24, [#allocation3]
    $region5: #{tpu_custom_call.1} parent=1 // pred_fallthru
      _
    // Predicated region
    $region6: #{tpu_custom_call.1} parent=1 // pred_check
      _
    $region7: #{tpu_custom_call.1} parent=1 // pred_check_branch
      %28 = sbr.rel (0) target = $region9
    $region8: #{tpu_custom_call.1} parent=1 // pred_region
      %s30 = ssub.s32 64, 64
      %31 = vsyncadd [#allocation6], %s30
      %s33 = sshll.u32 [#allocation5], 4
      %s34 = int_to_ptr.vmem [resolvable:$true] %s33
      %36 = dma.hbm_to_vmem [thread:$0]  %s1, 64, %s34, [#allocation6]
    $region9: #{tpu_custom_call.1} parent=1 // pred_fallthru
      _
    // Predicated region
    $region10: #{tpu_custom_call.1} parent=1 // pred_check
      _
    $region11: #{tpu_custom_call.1} parent=1 // pred_check_branch
      %38 = sbr.rel (0) target = $region13
    $region12: #{tpu_custom_call.1} parent=1 // pred_region
      %s40 = ssub.s32 64, 64
      %41 = vsyncadd [#allocation6], %s40
      %s43 = sshll.u32 [#allocation7], 4
      %s44 = int_to_ptr.vmem [resolvable:$true] %s43
      %46 = dma.hbm_to_vmem [thread:$0]  %s2, 64, %s44, [#allocation6]
    $region13: #{tpu_custom_call.1} parent=1 // pred_fallthru
      _
    // Predicated region
    $region14: #{tpu_custom_call.1} parent=1 // pred_check
      _
    $region15: #{tpu_custom_call.1} parent=1 // pred_check_branch
      %48 = sbr.rel (0) target = $region17
    $region16: #{tpu_custom_call.1} parent=1 // pred_region
      %s50 = ssub.s32 256, 256
      %51 = vsyncadd [#allocation9], %s50
      %s52 = sshll.u32 [#allocation8], 4
      %s53 = int_to_ptr.vmem [resolvable:$true] %s52
      %58 = dma.hbm_to_vmem [thread:$0]  %s3, 256, %s53, [#allocation9], 64, 64, 4
    $region17: #{tpu_custom_call.1} parent=1 // pred_fallthru
      _
    // Predicated region
    $region18: #{tpu_custom_call.1} parent=1 // pred_check
      _
    $region19: #{tpu_custom_call.1} parent=1 // pred_check_branch
      %60 = sbr.rel (0) target = $region21
    $region20: #{tpu_custom_call.1} parent=1 // pred_region
      %s62 = ssub.s32 256, 256
      %63 = vsyncadd [#allocation9], %s62
      %s64 = sshll.u32 [#allocation10], 4
      %s65 = int_to_ptr.vmem [resolvable:$true] %s64
      %70 = dma.hbm_to_vmem [thread:$0]  %s4, 256, %s65, [#allocation9], 64, 64, 4
    $region21: #{tpu_custom_call.1} parent=1 // pred_fallthru
      _
    // Predicated region
    $region22: #{tpu_custom_call.1} parent=1 // pred_check
      _
    $region23: #{tpu_custom_call.1} parent=1 // pred_check_branch
      %72 = sbr.rel (0) target = $region25
    $region24: #{tpu_custom_call.1} parent=1 // pred_region
      _
    $region25: #{tpu_custom_call.1} parent=1 // pred_fallthru
      _
    // Predicated region
    $region26: #{tpu_custom_call.1} parent=1 // pred_check
      _
    $region27: #{tpu_custom_call.1} parent=1 // pred_check_branch
      %74 = sbr.rel (0) target = $region29
    $region28: #{tpu_custom_call.1} parent=1 // pred_region
      _
    $region29: #{tpu_custom_call.1} parent=1 // pred_fallthru
      _
    // Predicated region
    $region30: #{tpu_custom_call.1} parent=1 // pred_check
      _
    $region31: #{tpu_custom_call.1} parent=1 // pred_check_branch
      %76 = sbr.rel (0) target = $region33
    $region32: #{tpu_custom_call.1} parent=1 // pred_region
      _
    $region33: #{tpu_custom_call.1} parent=1 // pred_fallthru
      _
    // Predicated region
    $region34: #{tpu_custom_call.1} parent=1 // pred_check
      _
    $region35: #{tpu_custom_call.1} parent=1 // pred_check_branch
      %78 = sbr.rel (0) target = $region37
    $region36: #{tpu_custom_call.1} parent=1 // pred_region
      %79 = dma.done [#allocation3], 64
    $region37: #{tpu_custom_call.1} parent=1 // pred_fallthru
      _
    // Predicated region
    $region38: #{tpu_custom_call.1} parent=1 // pred_check
      _
    $region39: #{tpu_custom_call.1} parent=1 // pred_check_branch
      %81 = sbr.rel (0) target = $region41
    $region40: #{tpu_custom_call.1} parent=1 // pred_region
      %82 = dma.done [#allocation6], 64
    $region41: #{tpu_custom_call.1} parent=1 // pred_fallthru
      _
    // Predicated region
    $region42: #{tpu_custom_call.1} parent=1 // pred_check
      _
    $region43: #{tpu_custom_call.1} parent=1 // pred_check_branch
      %84 = sbr.rel (0) target = $region45
    $region44: #{tpu_custom_call.1} parent=1 // pred_region
      %85 = dma.done [#allocation6], 64
    $region45: #{tpu_custom_call.1} parent=1 // pred_fallthru
      _
    // Predicated region
    $region46: #{tpu_custom_call.1} parent=1 // pred_check
      _
    $region47: #{tpu_custom_call.1} parent=1 // pred_check_branch
      %87 = sbr.rel (0) target = $region49
    $region48: #{tpu_custom_call.1} parent=1 // pred_region
      %88 = dma.done [#allocation9], 256
    $region49: #{tpu_custom_call.1} parent=1 // pred_fallthru
      _
    // Predicated region
    $region50: #{tpu_custom_call.1} parent=1 // pred_check
      _
    $region51: #{tpu_custom_call.1} parent=1 // pred_check_branch
      %90 = sbr.rel (0) target = $region53
    $region52: #{tpu_custom_call.1} parent=1 // pred_region
      %91 = dma.done [#allocation9], 256
    $region53: #{tpu_custom_call.1} parent=1 // pred_fallthru
      _
    %v93 = vld [vmem:[#allocation2] sm:$0xf]
    %v94 = vld [vmem:[#allocation8] sm:$0xf]
    %v95 = vld [vmem:[#allocation8 + $0x4] sm:$0xf]
    %v96 = vld [vmem:[#allocation8 + $0x8] sm:$0xf]
    %v97 = vld [vmem:[#allocation8 + $0xc] sm:$0xf]
    %v102 = vunpack.c.l.b16 %v94
    %v103 = vunpack.c.l.b16 %v95
    %v104 = vunpack.c.l.b16 %v96
    %v105 = vunpack.c.l.b16 %v97
    %v106 = vpack.c.b16 %v103, %v102
    %v107 = vpack.c.b16 %v105, %v104
    %vm110 = vcmask 261120
    %v112 = vsel %vm110, %v93, 0
    %114 = vmatprep.subr.bf16.mxu0 0
    %115 = vmatpush1.bf16.msra.mxu0 %v106
    %116 = vmatprep.subr.bf16.mxu0 0
    %117 = vmatpush1.bf16.msra.mxu0 %v107
    %118 = vmatprep.subr.bf16.mxu0 0
    %119 = vmatpush1.bf16.msra.mxu0 0
    %120 = vmatprep.subr.bf16.mxu0 0
    %121 = vmatpush1.bf16.msra.mxu0 0
    %122 = vmatprep.subr.bf16.mxu0 0
    %123 = vmatpush1.bf16.msra.mxu0 0
    %124 = vmatprep.subr.bf16.mxu0 0
    %125 = vmatpush1.bf16.msra.mxu0 0
    %126 = vmatprep.subr.bf16.mxu0 0
    %127 = vmatpush1.bf16.msra.mxu0 0
    %128 = vmatprep.subr.bf16.mxu0 0
    %129 = vmatpush1.bf16.msra.mxu0 0
    %130 = vmatprep.subr.bf16.mxu0 0
    %131 = vmatpush1.bf16.msra.mxu0 0
    %132 = vmatprep.subr.bf16.mxu0 0
    %133 = vmatpush1.bf16.msra.mxu0 0
    %134 = vmatprep.subr.bf16.mxu0 0
    %135 = vmatpush1.bf16.msra.mxu0 0
    %136 = vmatprep.subr.bf16.mxu0 0
    %137 = vmatpush1.bf16.msra.mxu0 0
    %138 = vmatprep.subr.bf16.mxu0 0
    %139 = vmatpush1.bf16.msra.mxu0 0
    %140 = vmatprep.subr.bf16.mxu0 0
    %141 = vmatpush1.bf16.msra.mxu0 0
    %142 = vmatprep.subr.bf16.mxu0 0
    %143 = vmatpush1.bf16.msra.mxu0 0
    %144 = vmatprep.subr.bf16.mxu0 0
    %145 = vmatpush1.bf16.msra.mxu0 0
    %146 = vmatprep.mubr.bf16.mxu0 0
    %147 = vmatmul.mubr.bf16.gmra.mrb[0].mxu0 %v112
    %v148 = vpop.f32.mrb[0].mxu0
    %v149 = vadd.f32 0.0, %v148
    %v150 = vpop.f32.mrb[0].mxu0
    %v151 = vpop.f32.mrb[0].mxu0
    %v152 = vpop.f32.mrb[0].mxu0
    %153 = vdwg.mxu0
    %v154 = vld [vmem:[#allocation5] sm:$0xf]
    %v155 = vld [vmem:[#allocation10] sm:$0xf]
    %v156 = vld [vmem:[#allocation10 + $0x4] sm:$0xf]
    %v157 = vld [vmem:[#allocation10 + $0x8] sm:$0xf]
    %v158 = vld [vmem:[#allocation10 + $0xc] sm:$0xf]
    %v163 = vunpack.c.l.b16 %v155
    %v164 = vunpack.c.l.b16 %v156
    %v165 = vunpack.c.l.b16 %v157
    %v166 = vunpack.c.l.b16 %v158
    %v167 = vpack.c.b16 %v164, %v163
    %v168 = vpack.c.b16 %v166, %v165
    %v172 = vsel %vm110, %v154, 0
    %174 = vmatprep.subr.bf16.mxu0 0
    %175 = vmatpush1.bf16.msra.mxu0 %v167
    %176 = vmatprep.subr.bf16.mxu0 0
    %177 = vmatpush1.bf16.msra.mxu0 %v168
    %178 = vmatprep.subr.bf16.mxu0 0
    %179 = vmatpush1.bf16.msra.mxu0 0
    %180 = vmatprep.subr.bf16.mxu0 0
    %181 = vmatpush1.bf16.msra.mxu0 0
    %182 = vmatprep.subr.bf16.mxu0 0
    %183 = vmatpush1.bf16.msra.mxu0 0
    %184 = vmatprep.subr.bf16.mxu0 0
    %185 = vmatpush1.bf16.msra.mxu0 0
    %186 = vmatprep.subr.bf16.mxu0 0
    %187 = vmatpush1.bf16.msra.mxu0 0
    %188 = vmatprep.subr.bf16.mxu0 0
    %189 = vmatpush1.bf16.msra.mxu0 0
    %190 = vmatprep.subr.bf16.mxu0 0
    %191 = vmatpush1.bf16.msra.mxu0 0
    %192 = vmatprep.subr.bf16.mxu0 0
    %193 = vmatpush1.bf16.msra.mxu0 0
    %194 = vmatprep.subr.bf16.mxu0 0
    %195 = vmatpush1.bf16.msra.mxu0 0
    %196 = vmatprep.subr.bf16.mxu0 0
    %197 = vmatpush1.bf16.msra.mxu0 0
    %198 = vmatprep.subr.bf16.mxu0 0
    %199 = vmatpush1.bf16.msra.mxu0 0
    %200 = vmatprep.subr.bf16.mxu0 0
    %201 = vmatpush1.bf16.msra.mxu0 0
    %202 = vmatprep.subr.bf16.mxu0 0
    %203 = vmatpush1.bf16.msra.mxu0 0
    %204 = vmatprep.subr.bf16.mxu0 0
    %205 = vmatpush1.bf16.msra.mxu0 0
    %206 = vmatprep.mubr.bf16.mxu0 0
    %207 = vmatmul.mubr.bf16.gmra.mrb[0].mxu0 %v172
    %v208 = vpop.f32.mrb[0].mxu0
    %v209 = vadd.f32 0.0, %v208
    %v210 = vpop.f32.mrb[0].mxu0
    %v211 = vpop.f32.mrb[0].mxu0
    %v212 = vpop.f32.mrb[0].mxu0
    %213 = vdwg.mxu0
    %v214 = vld [vmem:[#allocation7] sm:$0xf]
    %v215 = vld [vmem:[%s5] sm:$0xf]
    %v216 = vld [vmem:[%s5 + $0x4] sm:$0xf]
    %v217 = vld [vmem:[%s5 + $0x8] sm:$0xf]
    %v218 = vld [vmem:[%s5 + $0xc] sm:$0xf]
    %v223 = vunpack.c.l.b16 %v215
    %v224 = vunpack.c.l.b16 %v216
    %v225 = vunpack.c.l.b16 %v217
    %v226 = vunpack.c.l.b16 %v218
    %v227 = vpack.c.b16 %v224, %v223
    %v228 = vpack.c.b16 %v226, %v225
    %v232 = vsel %vm110, %v214, 0
    %234 = vmatprep.subr.bf16.mxu0 0
    %235 = vmatpush1.bf16.msra.mxu0 %v227
    %236 = vmatprep.subr.bf16.mxu0 0
    %237 = vmatpush1.bf16.msra.mxu0 %v228
    %238 = vmatprep.subr.bf16.mxu0 0
    %239 = vmatpush1.bf16.msra.mxu0 0
    %240 = vmatprep.subr.bf16.mxu0 0
    %241 = vmatpush1.bf16.msra.mxu0 0
    %242 = vmatprep.subr.bf16.mxu0 0
    %243 = vmatpush1.bf16.msra.mxu0 0
    %244 = vmatprep.subr.bf16.mxu0 0
    %245 = vmatpush1.bf16.msra.mxu0 0
    %246 = vmatprep.subr.bf16.mxu0 0
    %247 = vmatpush1.bf16.msra.mxu0 0
    %248 = vmatprep.subr.bf16.mxu0 0
    %249 = vmatpush1.bf16.msra.mxu0 0
    %250 = vmatprep.subr.bf16.mxu0 0
    %251 = vmatpush1.bf16.msra.mxu0 0
    %252 = vmatprep.subr.bf16.mxu0 0
    %253 = vmatpush1.bf16.msra.mxu0 0
    %254 = vmatprep.subr.bf16.mxu0 0
    %255 = vmatpush1.bf16.msra.mxu0 0
    %256 = vmatprep.subr.bf16.mxu0 0
    %257 = vmatpush1.bf16.msra.mxu0 0
    %258 = vmatprep.subr.bf16.mxu0 0
    %259 = vmatpush1.bf16.msra.mxu0 0
    %260 = vmatprep.subr.bf16.mxu0 0
    %261 = vmatpush1.bf16.msra.mxu0 0
    %262 = vmatprep.subr.bf16.mxu0 0
    %263 = vmatpush1.bf16.msra.mxu0 0
    %264 = vmatprep.subr.bf16.mxu0 0
    %265 = vmatpush1.bf16.msra.mxu0 0
    %266 = vmatprep.mubr.bf16.mxu0 0
    %267 = vmatmul.mubr.bf16.gmra.mrb[0].mxu0 %v232
    %v268 = vpop.f32.mrb[0].mxu0
    %v269 = vadd.f32 0.0, %v268
    %v270 = vpop.f32.mrb[0].mxu0
    %v271 = vpop.f32.mrb[0].mxu0
    %v272 = vpop.f32.mrb[0].mxu0
    %273 = vdwg.mxu0
    %v274 = vadd.f32 %v149, %v209
    %v275 = vadd.f32 %v274, %v269
    %v276 = vld [vmem:[%s6] sm:$0x1]
    %v278 = vlaneseq
    %v279 = vshrl.u32 %v278, 7
    %v280 = vsub.s32 0, %v279
    %v281 = vrot.slane %v276, %v280
    %v283 = vadd.f32 %v275, %v281
    %v284 = vxor.u32 %v283, 2147483648
    %v285 = vmul.f32 %v284, 1.442695
    %v286 = vpow.pop %v285
    %v287 = vadd.f32 %v286, 1.0
    %v288 = vrcp.pop %v287
    %v289 = vmul.f32 1.0, %v288
    %v290 = vld [vmem:[%s7] sm:$0x1]
    %v292 = vlaneseq
    %v293 = vshrl.u32 %v292, 7
    %v294 = vsub.s32 0, %v293
    %v295 = vrot.slane %v290, %v294
    %296 = vrot.lane.b32.xlu0 %v295, 96
    %v297 = vpop.permute.xlu0 %296
    %v299 = vadd.f32 %v149, %v297
    %v300 = vtanh.pop %v299
    %302 = vrot.lane.b32.xlu0 %v300, 32
    %v303 = vpop.permute.xlu0 %302
    %v305 = vmul.f32 %v289, %v303
    %306 = vrot.lane.b32.xlu0 %v295, 64
    %v307 = vpop.permute.xlu0 %306
    %v309 = vadd.f32 %v209, %v307
    %v310 = vtanh.pop %v309
    %312 = vrot.lane.b32.xlu0 %v310, 64
    %v313 = vpop.permute.xlu0 %312
    %v315 = vmul.f32 %v289, %v313
    %317 = vrot.lane.b32.xlu0 %v315, 96
    %v318 = vpop.permute.xlu0 %317
    %v320 = vadd.f32 %v305, %v318
    %321 = vrot.lane.b32.xlu0 %v295, 32
    %v322 = vpop.permute.xlu0 %321
    %v324 = vadd.f32 %v269, %v322
    %v325 = vtanh.pop %v324
    %327 = vrot.lane.b32.xlu0 %v325, 96
    %v328 = vpop.permute.xlu0 %327
    %v330 = vmul.f32 %v289, %v328
    %332 = vrot.lane.b32.xlu0 %v330, 64
    %v333 = vpop.permute.xlu0 %332
    %v335 = vadd.f32 %v320, %v333
    %336 = vst.msk [vmem:[#allocation11] sm:$0xff] %vm110, %v335
    // Predicated region
    $region54: #{tpu_custom_call.1} parent=1 // pred_check
      _
    $region55: #{tpu_custom_call.1} parent=1 // pred_check_branch
      %338 = sbr.rel (0) target = $region57
    $region56: #{tpu_custom_call.1} parent=1 // pred_region
      %s340 = ssub.s32 128, 128
      %341 = vsyncadd [#allocation4], %s340
      %s343 = sshll.u32 [#allocation11], 4
      %s344 = int_to_ptr.vmem [resolvable:$true] %s343
      %346 = dma.vmem_to_hbm [thread:$0]  %s344, 128, %s8, [#allocation4]
    $region57: #{tpu_custom_call.1} parent=1 // pred_fallthru
      _
    // Predicated region
    $region58: #{tpu_custom_call.1} parent=1 // pred_check
      _
    $region59: #{tpu_custom_call.1} parent=1 // pred_check_branch
      %348 = sbr.rel (0) target = $region61
    $region60: #{tpu_custom_call.1} parent=1 // pred_region
      %349 = dma.done [#allocation4], 128
    $region61: #{tpu_custom_call.1} parent=1 // pred_fallthru
      _
    %350 = vsyncpa [#allocation3], 1
    %351 = vsyncpa [#allocation6], 1
    %352 = vsyncpa [#allocation9], 1
    %353 = vsyncpa [#allocation4], 1

</llo_original>
